<compile_context>
chip_gen: v6e
topology: v6e:2x2x1
jax: 0.10.0
libtpu: 0.0.40
codegen_flags: <defaults>
</compile_context>

<pallas_src>
import functools

import jax
import jax.numpy as jnp
import numpy as np
from jax.experimental import pallas as pl
from jax.experimental.pallas import tpu as pltpu


_SINGLE_SHOT_LIMIT_BYTES = 20 << 20   # x+y resident in VMEM below this -> no grid
_VMEM_BUDGET_BYTES = 48 << 20         # conservative cap (v7x physical VMEM = 64 MiB)


def _layernorm(z, gamma, beta, eps=1e-5):
    # Two-pass stats (robust; matches nn.LayerNorm).
    mu = jnp.mean(z, axis=-1, keepdims=True)
    d = z - mu
    var = jnp.mean(d * d, axis=-1, keepdims=True)
    return d * jax.lax.rsqrt(var + eps) * gamma + beta


def _mi_head(x_avg, y_avg, sperm, wxy, b_stack, lng, lnb, w1ab, b1,
             ln2g, ln2b, w2_row, b2, out_ref, *, batch_size):
    """Fused projector + critic head on pooled (B, F) features.

    Only 3 MXU pushes on the serial chain; everything else is VPU/XLU/EUP.
    """
    B = batch_size
    H = w2_row.shape[-1]

    # row-id mask: rows [0,B) = x / joint half, rows [B,2B) = y / marginal half
    rmask = jax.lax.broadcasted_iota(jnp.int32, (2 * B, 1), 0) < B

    # ---- fused projectors: one MXU push for both x and y --------------------
    zin = jnp.concatenate([x_avg, y_avg], axis=0)                    # (2B, F)
    full = jnp.dot(zin, wxy, preferred_element_type=jnp.float32)     # (2B, 2H)
    # diagonal blocks: top rows take cols [:H] (x@Wx), bottom rows cols [H:] (y@Wy)
    pre = jnp.where(rmask, full[:, :H], full[:, H:]) + b_stack       # (2B, H)
    proj = _layernorm(pre, lng, lnb)                                 # [x_proj; y_proj]

    # ---- fused critic first layer: one MXU push for W1a and W1b -------------
    cfull = jnp.dot(proj, w1ab, preferred_element_type=jnp.float32)  # (2B, 2H)
    xa = cfull[:B, :H]                                               # x_proj @ W1a
    yb = cfull[B:, H:]                                               # y_proj @ W1b

    # ---- [yb ; perm @ yb] in a single matmul (shuffle + joint/marginal stack)
    # Exact only because sperm is [I ; one-hot permutation].
    yb2 = jnp.dot(sperm, yb, preferred_element_type=jnp.float32)     # (2B, H)

    h = jnp.concatenate([xa, xa], axis=0) + yb2 + b1                 # (2B, H)
    h = _layernorm(h, ln2g, ln2b)
    h = h * jax.nn.sigmoid(h)                                        # SiLU

    # ---- head as VPU mul + lane reduce (no final MXU round trip) ------------
    scores = jnp.sum(h * w2_row, axis=-1, keepdims=True) + b2        # (2B, 1)

    # ---- MI estimate via row-masked reductions (no sublane slicing) ---------
    joint_mean = jnp.sum(jnp.where(rmask, scores, 0.0)) * (1.0 / B)
    marg = jnp.where(rmask, -jnp.inf, scores)
    m = jnp.max(marg)
    ssum = jnp.sum(jnp.where(rmask, 0.0, jnp.exp(scores - m)))
    lse = m + jnp.log(ssum)
    out_ref[0, 0] = joint_mean - lse + float(np.log(B))


def _mi_kernel_fused(x_ref, y_ref, sperm_ref, wxy_ref, bst_ref, lng_ref, lnb_ref,
                     w1ab_ref, b1_ref, ln2g_ref, ln2b_ref, w2r_ref, b2_ref,
                     out_ref, *, batch_size, seq_len):
    # Single-shot path: whole (B, S, F) operands resident in VMEM, no grid.
    inv_s = 1.0 / float(seq_len)
    x_avg = jnp.sum(x_ref[...], axis=1) * inv_s
    y_avg = jnp.sum(y_ref[...], axis=1) * inv_s
    _mi_head(x_avg, y_avg, sperm_ref[...], wxy_ref[...], bst_ref[...],
             lng_ref[...], lnb_ref[...], w1ab_ref[...], b1_ref[...],
             ln2g_ref[...], ln2b_ref[...], w2r_ref[...], b2_ref[...],
             out_ref, batch_size=batch_size)


def _mi_kernel_streamed(x_ref, y_ref, sperm_ref, wxy_ref, bst_ref, lng_ref,
                        lnb_ref, w1ab_ref, b1_ref, ln2g_ref, ln2b_ref, w2r_ref,
                        b2_ref, out_ref, xsum_ref, ysum_ref,
                        *, batch_size, seq_len):
    # Streaming path for large S: (B, tS, F) tiles accumulated into (B, F).
    s = pl.program_id(0)

    @pl.when(s == 0)
    def _init():
        xsum_ref[...] = jnp.zeros_like(xsum_ref)
        ysum_ref[...] = jnp.zeros_like(ysum_ref)

    xsum_ref[...] += jnp.sum(x_ref[...], axis=1)
    ysum_ref[...] += jnp.sum(y_ref[...], axis=1)

    @pl.when(s == pl.num_programs(0) - 1)
    def _finalize():
        inv_s = 1.0 / float(seq_len)
        _mi_head(xsum_ref[...] * inv_s, ysum_ref[...] * inv_s, sperm_ref[...],
                 wxy_ref[...], bst_ref[...], lng_ref[...], lnb_ref[...],
                 w1ab_ref[...], b1_ref[...], ln2g_ref[...], ln2b_ref[...],
                 w2r_ref[...], b2_ref[...], out_ref, batch_size=batch_size)


def _pick_seq_tile(B, S, F, itemsize):
    # Largest multiple-of-8 divisor of S whose (B, t, F) block, double-buffered
    # for two inputs, fits the conservative VMEM budget.
    per_block_budget = _VMEM_BUDGET_BYTES // 4   # 2 inputs x 2 pipeline buffers
    best = None
    for t in range(8, S + 1, 8):
        if S % t == 0 and B * t * F * itemsize <= per_block_budget:
            best = t
    return best


def mi_estimator_forward(x, y, perm_idx, params, *, seq_tile=None):
    """x, y: (B, S, F) float32; perm_idx: (B,) integer permutation indices."""
    B, S, F = x.shape
    (wx, bx, wy, by, ln_g, ln_b, w1, b1, ln2_g, ln2_b, w2, b2) = params
    H = wx.shape[1]

    # ---- host-side operand fusion (outside the kernel, done once per call) --
    wxy = jnp.concatenate([wx, wy], axis=1)                           # (F, 2H)
    b_stack = jnp.concatenate([jnp.broadcast_to(bx, (B, H)),
                               jnp.broadcast_to(by, (B, H))], axis=0)  # (2B, H)
    w1ab = jnp.concatenate([w1[:H], w1[H:]], axis=1)                  # (H, 2H)
    w2_row = jnp.reshape(w2, (1, H))                                  # (1, H)
    # [I_B ; one_hot(perm)]: fuses the batch shuffle with joint/marginal stack.
    stack_perm = jnp.concatenate(
        [jnp.eye(B, dtype=jnp.float32),
         jax.nn.one_hot(perm_idx, B, dtype=jnp.float32)], axis=0)     # (2B, B)

    head_ops = (stack_perm, wxy, b_stack, ln_g, ln_b, w1ab, b1,
                ln2_g, ln2_b, w2_row, b2)

    vmem_full = pl.BlockSpec(memory_space=pltpu.MemorySpace.VMEM)
    out_spec = pl.BlockSpec(memory_space=pltpu.MemorySpace.SMEM)
    out_shape = jax.ShapeDtypeStruct((1, 1), jnp.float32)

    itemsize = jnp.dtype(x.dtype).itemsize
    input_bytes = 2 * B * S * F * itemsize

    if seq_tile is not None and seq_tile >= S:
        seq_tile = None                       # full S in one block == single shot
    if seq_tile is None and input_bytes > _SINGLE_SHOT_LIMIT_BYTES:
        seq_tile = _pick_seq_tile(B, S, F, itemsize)

    if seq_tile is None:
        # Small/medium inputs: no grid, no accumulators, no per-step overhead.
        out = pl.pallas_call(
            functools.partial(_mi_kernel_fused, batch_size=B, seq_len=S),
            in_specs=[vmem_full] * (2 + len(head_ops)),
            out_specs=out_spec,
            out_shape=out_shape,
        )(x, y, *head_ops)
    else:
        assert S % seq_tile == 0 and (seq_tile % 8 == 0 or seq_tile == S), (
            "seq_tile must divide S and be a multiple of 8 (or equal S)")
        seq_spec = pl.BlockSpec((B, seq_tile, F), lambda s: (0, s, 0))
        out = pl.pallas_call(
            functools.partial(_mi_kernel_streamed, batch_size=B, seq_len=S),
            grid=(S // seq_tile,),
            in_specs=[seq_spec, seq_spec] + [vmem_full] * len(head_ops),
            out_specs=out_spec,
            out_shape=out_shape,
            scratch_shapes=[pltpu.VMEM((B, F), jnp.float32),
                            pltpu.VMEM((B, F), jnp.float32)],
            # NOTE: the running xsum/ysum accumulation requires the sequence
            # axis to execute sequentially -> must stay "arbitrary".
            compiler_params=pltpu.CompilerParams(
                dimension_semantics=("arbitrary",),
                vmem_limit_bytes=_VMEM_BUDGET_BYTES),
        )(x, y, *head_ops)
    return out[0, 0]


def make_params(key, feature_dim, hidden_dim):
    """Deterministic synthetic parameters (Linear weights stored as (in, out))."""
    ks = jax.random.split(key, 8)
    sf = 1.0 / np.sqrt(feature_dim)
    sh = 1.0 / np.sqrt(2 * hidden_dim)
    sh2 = 1.0 / np.sqrt(hidden_dim)
    wx = jax.random.uniform(ks[0], (feature_dim, hidden_dim), jnp.float32, -sf, sf)
    bx = jax.random.uniform(ks[1], (1, hidden_dim), jnp.float32, -sf, sf)
    wy = jax.random.uniform(ks[2], (feature_dim, hidden_dim), jnp.float32, -sf, sf)
    by = jax.random.uniform(ks[3], (1, hidden_dim), jnp.float32, -sf, sf)
    ln_g = jnp.ones((1, hidden_dim), jnp.float32)
    ln_b = jnp.zeros((1, hidden_dim), jnp.float32)
    w1 = jax.random.uniform(ks[4], (2 * hidden_dim, hidden_dim), jnp.float32, -sh, sh)
    b1 = jax.random.uniform(ks[5], (1, hidden_dim), jnp.float32, -sh, sh)
    ln2_g = jnp.ones((1, hidden_dim), jnp.float32)
    ln2_b = jnp.zeros((1, hidden_dim), jnp.float32)
    w2 = jax.random.uniform(ks[6], (hidden_dim, 1), jnp.float32, -sh2, sh2)
    b2 = jax.random.uniform(ks[7], (1, 1), jnp.float32, -sh2, sh2)
    return (wx, bx, wy, by, ln_g, ln_b, w1, b1, ln2_g, ln2_b, w2, b2)


def reference_forward(x, y, perm_idx, params):
    """Pure-JAX reference of the PyTorch forward (correctness check)."""
    (wx, bx, wy, by, ln_g, ln_b, w1, b1, ln2_g, ln2_b, w2, b2) = params
    B, S, _ = x.shape

    def ln(z, g, b, eps=1e-5):
        mu = jnp.mean(z, axis=-1, keepdims=True)
        var = jnp.mean((z - mu) ** 2, axis=-1, keepdims=True)
        return (z - mu) * jax.lax.rsqrt(var + eps) * g + b

    x_avg = x.sum(axis=1) / S
    y_avg = y.sum(axis=1) / S
    x_proj = ln(x_avg @ wx + bx, ln_g, ln_b)
    y_proj = ln(y_avg @ wy + by, ln_g, ln_b)
    y_shuf = y_proj[perm_idx]

    def critic(a, b):
        h = ln(jnp.concatenate([a, b], axis=1) @ w1 + b1, ln2_g, ln2_b)
        h = h * jax.nn.sigmoid(h)
        return h @ w2 + b2

    js = critic(x_proj, y_proj)
    ms = critic(x_proj, y_shuf)
    return (jnp.mean(js) - jax.scipy.special.logsumexp(ms, axis=0)[0]
            + jnp.log(float(B)))


if __name__ == "__main__":
    B, S, F, H = 8, 16, 32, 32  # batch, sequence, feature_dim, hidden_dim

    key = jax.random.PRNGKey(0)
    kx, ky, kp, kperm = jax.random.split(key, 4)
    x = jax.random.normal(kx, (B, S, F), jnp.float32)
    y = jax.random.normal(ky, (B, S, F), jnp.float32)
    params = make_params(kp, F, H)

    # torch.randperm equivalent: deterministic host-side permutation indices.
    perm_idx = jax.random.permutation(kperm, B)

    with jax.default_matmul_precision("float32"):
        ref = jax.block_until_ready(reference_forward(x, y, perm_idx, params))

    # Default path: single-shot fused kernel (no grid).
    out = jax.block_until_ready(mi_estimator_forward(x, y, perm_idx, params))
    np.testing.assert_allclose(np.asarray(out), np.asarray(ref),
                               rtol=1e-3, atol=1e-3)

    # Also exercise the streamed (large-S) path on the same data.
    out_s = jax.block_until_ready(
        mi_estimator_forward(x, y, perm_idx, params, seq_tile=8))
    np.testing.assert_allclose(np.asarray(out_s), np.asarray(ref),
                               rtol=1e-3, atol=1e-3)

    print("KERNEL_OK")
</pallas_src>

<mosaic_0001>
module attributes {stable_mosaic.version = 11 : i64} {
  func.func @_mi_kernel_fused(%arg0: memref<8x16x32xf32, #tpu.memory_space<vmem>>, %arg1: memref<8x16x32xf32, #tpu.memory_space<vmem>>, %arg2: memref<16x8xf32, #tpu.memory_space<vmem>>, %arg3: memref<32x64xf32, #tpu.memory_space<vmem>>, %arg4: memref<16x32xf32, #tpu.memory_space<vmem>>, %arg5: memref<1x32xf32, #tpu.memory_space<vmem>>, %arg6: memref<1x32xf32, #tpu.memory_space<vmem>>, %arg7: memref<32x64xf32, #tpu.memory_space<vmem>>, %arg8: memref<1x32xf32, #tpu.memory_space<vmem>>, %arg9: memref<1x32xf32, #tpu.memory_space<vmem>>, %arg10: memref<1x32xf32, #tpu.memory_space<vmem>>, %arg11: memref<1x32xf32, #tpu.memory_space<vmem>>, %arg12: memref<1x1xf32, #tpu.memory_space<vmem>>, %arg13: memref<1x1xf32, #tpu.memory_space<smem>>) attributes {dimension_semantics = [], scalar_prefetch = 0 : i64, scratch_operands = 0 : i64, tpu.core_type = #tpu.core_type<tc>} {
    %c0 = arith.constant 0 : index
    %c0_0 = arith.constant 0 : index
    %c0_1 = arith.constant 0 : index
    %0 = vector.load %arg0[%c0, %c0_0, %c0_1] : memref<8x16x32xf32, #tpu.memory_space<vmem>>, vector<8x16x32xf32>
    %cst = arith.constant dense<0.000000e+00> : vector<8x32xf32>
    %1 = vector.multi_reduction <add>, %0, %cst [1] : vector<8x16x32xf32> to vector<8x32xf32>
    %cst_2 = arith.constant 6.250000e-02 : f32
    %2 = vector.broadcast %cst_2 : f32 to vector<8x32xf32>
    %3 = arith.mulf %1, %2 : vector<8x32xf32>
    %c0_3 = arith.constant 0 : index
    %c0_4 = arith.constant 0 : index
    %c0_5 = arith.constant 0 : index
    %4 = vector.load %arg1[%c0_3, %c0_4, %c0_5] : memref<8x16x32xf32, #tpu.memory_space<vmem>>, vector<8x16x32xf32>
    %cst_6 = arith.constant dense<0.000000e+00> : vector<8x32xf32>
    %5 = vector.multi_reduction <add>, %4, %cst_6 [1] : vector<8x16x32xf32> to vector<8x32xf32>
    %cst_7 = arith.constant 6.250000e-02 : f32
    %6 = vector.broadcast %cst_7 : f32 to vector<8x32xf32>
    %7 = arith.mulf %5, %6 : vector<8x32xf32>
    %c0_8 = arith.constant 0 : index
    %c0_9 = arith.constant 0 : index
    %8 = vector.load %arg2[%c0_8, %c0_9] : memref<16x8xf32, #tpu.memory_space<vmem>>, vector<16x8xf32>
    %c0_10 = arith.constant 0 : index
    %c0_11 = arith.constant 0 : index
    %9 = vector.load %arg3[%c0_10, %c0_11] : memref<32x64xf32, #tpu.memory_space<vmem>>, vector<32x64xf32>
    %c0_12 = arith.constant 0 : index
    %c0_13 = arith.constant 0 : index
    %10 = vector.load %arg4[%c0_12, %c0_13] : memref<16x32xf32, #tpu.memory_space<vmem>>, vector<16x32xf32>
    %c0_14 = arith.constant 0 : index
    %c0_15 = arith.constant 0 : index
    %11 = vector.load %arg5[%c0_14, %c0_15] : memref<1x32xf32, #tpu.memory_space<vmem>>, vector<1x32xf32>
    %c0_16 = arith.constant 0 : index
    %c0_17 = arith.constant 0 : index
    %12 = vector.load %arg6[%c0_16, %c0_17] : memref<1x32xf32, #tpu.memory_space<vmem>>, vector<1x32xf32>
    %c0_18 = arith.constant 0 : index
    %c0_19 = arith.constant 0 : index
    %13 = vector.load %arg7[%c0_18, %c0_19] : memref<32x64xf32, #tpu.memory_space<vmem>>, vector<32x64xf32>
    %c0_20 = arith.constant 0 : index
    %c0_21 = arith.constant 0 : index
    %14 = vector.load %arg8[%c0_20, %c0_21] : memref<1x32xf32, #tpu.memory_space<vmem>>, vector<1x32xf32>
    %c0_22 = arith.constant 0 : index
    %c0_23 = arith.constant 0 : index
    %15 = vector.load %arg9[%c0_22, %c0_23] : memref<1x32xf32, #tpu.memory_space<vmem>>, vector<1x32xf32>
    %c0_24 = arith.constant 0 : index
    %c0_25 = arith.constant 0 : index
    %16 = vector.load %arg10[%c0_24, %c0_25] : memref<1x32xf32, #tpu.memory_space<vmem>>, vector<1x32xf32>
    %c0_26 = arith.constant 0 : index
    %c0_27 = arith.constant 0 : index
    %17 = vector.load %arg11[%c0_26, %c0_27] : memref<1x32xf32, #tpu.memory_space<vmem>>, vector<1x32xf32>
    %c0_28 = arith.constant 0 : index
    %c0_29 = arith.constant 0 : index
    %18 = vector.load %arg12[%c0_28, %c0_29] : memref<1x1xf32, #tpu.memory_space<vmem>>, vector<1x1xf32>
    %19 = tpu.iota {dimensions = array<i32: 0>} : vector<16x1xi32>
    %c8_i32 = arith.constant 8 : i32
    %20 = vector.broadcast %c8_i32 : i32 to vector<16x1xi32>
    %21 = arith.cmpi slt, %19, %20 : vector<16x1xi32>
    %22 = tpu.concatenate %3, %7 in 0 : vector<8x32xf32>, vector<8x32xf32> -> vector<16x32xf32>
    %cst_30 = arith.constant dense<0.000000e+00> : vector<16x64xf32>
    %23 = tpu.matmul %22, %9, %cst_30 {dimension_numbers = #tpu.dot_dimension_numbers<[1], [0], [0], [1], [0, 0, 1, 1], [], []>} : vector<16x32xf32>, vector<32x64xf32>, vector<16x64xf32> -> vector<16x64xf32>
    %24 = vector.extract_strided_slice %23 {offsets = [0, 0], sizes = [16, 32], strides = [1, 1]} : vector<16x64xf32> to vector<16x32xf32>
    %25 = vector.extract_strided_slice %23 {offsets = [0, 32], sizes = [16, 32], strides = [1, 1]} : vector<16x64xf32> to vector<16x32xf32>
    %26 = vector.shape_cast %21 : vector<16x1xi1> to vector<16x1xi1>
    %27 = vector.broadcast %26 : vector<16x1xi1> to vector<16x32xi1>
    %28 = arith.select %27, %24, %25 : vector<16x32xi1>, vector<16x32xf32>
    %29 = arith.addf %28, %10 : vector<16x32xf32>
    %cst_31 = arith.constant dense<0.000000e+00> : vector<16xf32>
    %30 = vector.multi_reduction <add>, %29, %cst_31 [1] : vector<16x32xf32> to vector<16xf32>
    %31 = vector.shape_cast %30 : vector<16xf32> to vector<16x1xf32>
    %cst_32 = arith.constant 3.200000e+01 : f32
    %32 = vector.broadcast %cst_32 : f32 to vector<16x1xf32>
    %33 = arith.divf %31, %32 : vector<16x1xf32>
    %34 = vector.broadcast %33 : vector<16x1xf32> to vector<16x32xf32>
    %35 = arith.subf %29, %34 : vector<16x32xf32>
    %36 = arith.mulf %35, %35 : vector<16x32xf32>
    %cst_33 = arith.constant dense<0.000000e+00> : vector<16xf32>
    %37 = vector.multi_reduction <add>, %36, %cst_33 [1] : vector<16x32xf32> to vector<16xf32>
    %38 = vector.shape_cast %37 : vector<16xf32> to vector<16x1xf32>
    %cst_34 = arith.constant 3.200000e+01 : f32
    %39 = vector.broadcast %cst_34 : f32 to vector<16x1xf32>
    %40 = arith.divf %38, %39 : vector<16x1xf32>
    %cst_35 = arith.constant 9.99999974E-6 : f32
    %41 = vector.broadcast %cst_35 : f32 to vector<16x1xf32>
    %42 = arith.addf %40, %41 : vector<16x1xf32>
    %43 = math.rsqrt %42 : vector<16x1xf32>
    %44 = vector.broadcast %43 : vector<16x1xf32> to vector<16x32xf32>
    %45 = arith.mulf %35, %44 : vector<16x32xf32>
    %46 = vector.broadcast %11 : vector<1x32xf32> to vector<16x32xf32>
    %47 = arith.mulf %45, %46 : vector<16x32xf32>
    %48 = vector.broadcast %12 : vector<1x32xf32> to vector<16x32xf32>
    %49 = arith.addf %47, %48 : vector<16x32xf32>
    %cst_36 = arith.constant dense<0.000000e+00> : vector<16x64xf32>
    %50 = tpu.matmul %49, %13, %cst_36 {dimension_numbers = #tpu.dot_dimension_numbers<[1], [0], [0], [1], [0, 0, 1, 1], [], []>} : vector<16x32xf32>, vector<32x64xf32>, vector<16x64xf32> -> vector<16x64xf32>
    %51 = vector.extract_strided_slice %50 {offsets = [0, 0], sizes = [8, 32], strides = [1, 1]} : vector<16x64xf32> to vector<8x32xf32>
    %52 = vector.extract_strided_slice %50 {offsets = [8, 32], sizes = [8, 32], strides = [1, 1]} : vector<16x64xf32> to vector<8x32xf32>
    %cst_37 = arith.constant dense<0.000000e+00> : vector<16x32xf32>
    %53 = tpu.matmul %8, %52, %cst_37 {dimension_numbers = #tpu.dot_dimension_numbers<[1], [0], [0], [1], [0, 0, 1, 1], [], []>} : vector<16x8xf32>, vector<8x32xf32>, vector<16x32xf32> -> vector<16x32xf32>
    %54 = tpu.concatenate %51, %51 in 0 : vector<8x32xf32>, vector<8x32xf32> -> vector<16x32xf32>
    %55 = arith.addf %54, %53 : vector<16x32xf32>
    %56 = vector.broadcast %14 : vector<1x32xf32> to vector<16x32xf32>
    %57 = arith.addf %55, %56 : vector<16x32xf32>
    %cst_38 = arith.constant dense<0.000000e+00> : vector<16xf32>
    %58 = vector.multi_reduction <add>, %57, %cst_38 [1] : vector<16x32xf32> to vector<16xf32>
    %59 = vector.shape_cast %58 : vector<16xf32> to vector<16x1xf32>
    %cst_39 = arith.constant 3.200000e+01 : f32
    %60 = vector.broadcast %cst_39 : f32 to vector<16x1xf32>
    %61 = arith.divf %59, %60 : vector<16x1xf32>
    %62 = vector.broadcast %61 : vector<16x1xf32> to vector<16x32xf32>
    %63 = arith.subf %57, %62 : vector<16x32xf32>
    %64 = arith.mulf %63, %63 : vector<16x32xf32>
    %cst_40 = arith.constant dense<0.000000e+00> : vector<16xf32>
    %65 = vector.multi_reduction <add>, %64, %cst_40 [1] : vector<16x32xf32> to vector<16xf32>
    %66 = vector.shape_cast %65 : vector<16xf32> to vector<16x1xf32>
    %cst_41 = arith.constant 3.200000e+01 : f32
    %67 = vector.broadcast %cst_41 : f32 to vector<16x1xf32>
    %68 = arith.divf %66, %67 : vector<16x1xf32>
    %cst_42 = arith.constant 9.99999974E-6 : f32
    %69 = vector.broadcast %cst_42 : f32 to vector<16x1xf32>
    %70 = arith.addf %68, %69 : vector<16x1xf32>
    %71 = math.rsqrt %70 : vector<16x1xf32>
    %72 = vector.broadcast %71 : vector<16x1xf32> to vector<16x32xf32>
    %73 = arith.mulf %63, %72 : vector<16x32xf32>
    %74 = vector.broadcast %15 : vector<1x32xf32> to vector<16x32xf32>
    %75 = arith.mulf %73, %74 : vector<16x32xf32>
    %76 = vector.broadcast %16 : vector<1x32xf32> to vector<16x32xf32>
    %77 = arith.addf %75, %76 : vector<16x32xf32>
    %78 = arith.negf %77 : vector<16x32xf32>
    %79 = math.exp %78 : vector<16x32xf32>
    %cst_43 = arith.constant 1.000000e+00 : f32
    %80 = vector.broadcast %cst_43 : f32 to vector<16x32xf32>
    %81 = arith.addf %80, %79 : vector<16x32xf32>
    %82 = arith.divf %80, %81 : vector<16x32xf32>
    %83 = arith.mulf %77, %82 : vector<16x32xf32>
    %84 = vector.broadcast %17 : vector<1x32xf32> to vector<16x32xf32>
    %85 = arith.mulf %83, %84 : vector<16x32xf32>
    %cst_44 = arith.constant dense<0.000000e+00> : vector<16xf32>
    %86 = vector.multi_reduction <add>, %85, %cst_44 [1] : vector<16x32xf32> to vector<16xf32>
    %87 = vector.shape_cast %86 : vector<16xf32> to vector<16x1xf32>
    %88 = vector.broadcast %18 : vector<1x1xf32> to vector<16x1xf32>
    %89 = arith.addf %87, %88 : vector<16x1xf32>
    %cst_45 = arith.constant 0.000000e+00 : f32
    %90 = vector.broadcast %cst_45 : f32 to vector<16x1xf32>
    %91 = arith.select %21, %89, %90 : vector<16x1xi1>, vector<16x1xf32>
    %92 = vector.shape_cast %91 : vector<16x1xf32> to vector<1x16x1xf32>
    %cst_46 = arith.constant dense<0.000000e+00> : vector<1xf32>
    %93 = vector.multi_reduction <add>, %92, %cst_46 [1, 2] : vector<1x16x1xf32> to vector<1xf32>
    %94 = vector.shape_cast %93 : vector<1xf32> to vector<1x1x1xf32>
    %95 = vector.extract %94[0, 0, 0] : f32 from vector<1x1x1xf32>
    %cst_47 = arith.constant 1.250000e-01 : f32
    %96 = arith.mulf %95, %cst_47 : f32
    %cst_48 = arith.constant 0xFF800000 : f32
    %97 = vector.broadcast %cst_48 : f32 to vector<16x1xf32>
    %98 = arith.select %21, %97, %89 : vector<16x1xi1>, vector<16x1xf32>
    %99 = vector.shape_cast %98 : vector<16x1xf32> to vector<1x16x1xf32>
    %cst_49 = arith.constant dense<0xFF800000> : vector<1xf32>
    %100 = vector.multi_reduction <maximumf>, %99, %cst_49 [1, 2] : vector<1x16x1xf32> to vector<1xf32>
    %101 = vector.shape_cast %100 : vector<1xf32> to vector<1x1x1xf32>
    %102 = vector.extract %101[0, 0, 0] : f32 from vector<1x1x1xf32>
    %103 = vector.broadcast %102 : f32 to vector<16x1xf32>
    %104 = arith.subf %89, %103 : vector<16x1xf32>
    %105 = math.exp %104 : vector<16x1xf32>
    %cst_50 = arith.constant 0.000000e+00 : f32
    %106 = vector.broadcast %cst_50 : f32 to vector<16x1xf32>
    %107 = arith.select %21, %106, %105 : vector<16x1xi1>, vector<16x1xf32>
    %108 = vector.shape_cast %107 : vector<16x1xf32> to vector<1x16x1xf32>
    %cst_51 = arith.constant dense<0.000000e+00> : vector<1xf32>
    %109 = vector.multi_reduction <add>, %108, %cst_51 [1, 2] : vector<1x16x1xf32> to vector<1xf32>
    %110 = vector.shape_cast %109 : vector<1xf32> to vector<1x1x1xf32>
    %111 = vector.extract %110[0, 0, 0] : f32 from vector<1x1x1xf32>
    %112 = math.log %111 : f32
    %113 = arith.addf %102, %112 : f32
    %114 = arith.subf %96, %113 : f32
    %cst_52 = arith.constant 2.07944155 : f32
    %115 = arith.addf %114, %cst_52 : f32
    %c0_53 = arith.constant 0 : index
    %c0_54 = arith.constant 0 : index
    %116 = memref.load %arg13[%c0_53, %c0_54] : memref<1x1xf32, #tpu.memory_space<smem>>
    memref.store %115, %arg13[%c0_53, %c0_54] : memref<1x1xf32, #tpu.memory_space<smem>>
    return
  }
}

</mosaic_0001>

<llo_original>
// kernel: tpu_custom_call.1
$region0: #{tpu_custom_call.1}
  #allocation0 [shape = 'u32[]', space=smem, size = 0x4, offset = 0x4, fixed_abs, tag = 'smem constant byte address 0x4 - core index']
  #allocation1 [shape = 'u32[144,128]{1,0:T(1,128)}', space=vmem, size = 0x12000, scoped, tag = 'internal scratch']
  #allocation2 [shape = 'f32[1,1]{1,0:T(1,128)S(1)}', space=vmem, size = 0x200, scoped, tag = 'scoped memory for tpu_custom_call.1']
  %s0 = inlined_call_operand.hbm [shape: f32[8,16,32], index: 0, kind: input, shape index: {}]
  %s1 = inlined_call_operand.hbm [shape: f32[8,16,32], index: 1, kind: input, shape index: {}]
  %s2 = inlined_call_operand.vmem [shape: f32[16,8], index: 2, kind: input, shape index: {}]
  %s3 = inlined_call_operand.hbm [shape: f32[32,64], index: 3, kind: input, shape index: {}]
  %s4 = inlined_call_operand.hbm [shape: f32[16,32], index: 4, kind: input, shape index: {}]
  %s5 = inlined_call_operand.vmem [shape: f32[1,32], index: 5, kind: input, shape index: {}]
  %s6 = inlined_call_operand.vmem [shape: f32[1,32], index: 6, kind: input, shape index: {}]
  %s7 = inlined_call_operand.vmem [shape: f32[32,64], index: 7, kind: input, shape index: {}]
  %s8 = inlined_call_operand.vmem [shape: f32[1,32], index: 8, kind: input, shape index: {}]
  %s9 = inlined_call_operand.vmem [shape: f32[1,32], index: 9, kind: input, shape index: {}]
  %s10 = inlined_call_operand.vmem [shape: f32[1,32], index: 10, kind: input, shape index: {}]
  %s11 = inlined_call_operand.vmem [shape: f32[1,32], index: 11, kind: input, shape index: {}]
  %s12 = inlined_call_operand.<no memory space> [shape: f32[1,1], index: 12, kind: input, shape index: {}]
  %s13 = inlined_call_operand.hbm [shape: f32[1,1], index: 13, kind: output, shape index: {}]
  %s14 = sld [smem:[#allocation0]]
  $region78: #{tpu_custom_call.1} parent=0
    _
  %s16 = ssub.s32 1, %s14
  %s17 = scalar_select 0, %s16, %s14
  %v18 = vstv %s12
  %19 = vst [vmem:[#allocation2] sm:$0x1] %v18
  $region1: #{tpu_custom_call.1} parent=0
    #allocation3 [shape = 'u8[65536]{0}', space=vmem, size = 0x10000, scoped, tag = 'input window, operand 0, single buffered']
    #allocation4 [shape = 's32[1]{0}', space=sflag, size = 0x4, scoped, tag = 'scoped memory for tpu_custom_call.1']
    #allocation5 [shape = 's32[1]{0}', space=sflag, size = 0x4, scoped, tag = 'scoped memory for tpu_custom_call.1']
    #allocation6 [shape = 'u8[65536]{0}', space=vmem, size = 0x10000, scoped, tag = 'input window, operand 1, single buffered']
    #allocation7 [shape = 's32[1]{0}', space=sflag, size = 0x4, scoped, tag = 'scoped memory for tpu_custom_call.1']
    #allocation8 [shape = 'u8[16384]{0}', space=vmem, size = 0x4000, scoped, tag = 'input window, operand 3, single buffered']
    #allocation9 [shape = 'u8[8192]{0}', space=vmem, size = 0x2000, scoped, tag = 'input window, operand 4, single buffered']
    #allocation10 [shape = 's32[1]{0}', space=sflag, size = 0x4, scoped, tag = 'scoped memory for tpu_custom_call.1']
    #allocation11 [shape = 'u8[512]{0}', space=smem, size = 0x200, scoped, tag = 'output window, operand 0, single buffered']
    %20 = vsyncpa [#allocation4], 0
    %21 = vsyncpa [#allocation7], 0
    %22 = vsyncpa [#allocation10], 0
    %23 = vsyncpa [#allocation5], 0
    // Predicated region
    $region2: #{tpu_custom_call.1} parent=1 // pred_check
      _
    $region3: #{tpu_custom_call.1} parent=1 // pred_check_branch
      %25 = sbr.rel (0) target = $region5
    $region4: #{tpu_custom_call.1} parent=1 // pred_region
      %s27 = ssub.s32 2048, 2048
      %28 = vsyncadd [#allocation4], %s27
      %s29 = sshll.u32 [#allocation3], 4
      %s30 = int_to_ptr.vmem [resolvable:$true] %s29
      %35 = dma.hbm_to_vmem [thread:$0]  %s0, 2048, %s30, [#allocation4], 128, 128, 8
    $region5: #{tpu_custom_call.1} parent=1 // pred_fallthru
      _
    // Predicated region
    $region6: #{tpu_custom_call.1} parent=1 // pred_check
      _
    $region7: #{tpu_custom_call.1} parent=1 // pred_check_branch
      %37 = sbr.rel (0) target = $region9
    $region8: #{tpu_custom_call.1} parent=1 // pred_region
      %s39 = ssub.s32 2048, 2048
      %40 = vsyncadd [#allocation7], %s39
      %s41 = sshll.u32 [#allocation6], 4
      %s42 = int_to_ptr.vmem [resolvable:$true] %s41
      %47 = dma.hbm_to_vmem [thread:$0]  %s1, 2048, %s42, [#allocation7], 128, 128, 8
    $region9: #{tpu_custom_call.1} parent=1 // pred_fallthru
      _
    // Predicated region
    $region10: #{tpu_custom_call.1} parent=1 // pred_check
      _
    $region11: #{tpu_custom_call.1} parent=1 // pred_check_branch
      %49 = sbr.rel (0) target = $region13
    $region12: #{tpu_custom_call.1} parent=1 // pred_region
      _
    $region13: #{tpu_custom_call.1} parent=1 // pred_fallthru
      _
    // Predicated region
    $region14: #{tpu_custom_call.1} parent=1 // pred_check
      _
    $region15: #{tpu_custom_call.1} parent=1 // pred_check_branch
      %51 = sbr.rel (0) target = $region17
    $region16: #{tpu_custom_call.1} parent=1 // pred_region
      %s53 = ssub.s32 512, 512
      %54 = vsyncadd [#allocation7], %s53
      %s55 = sshll.u32 [#allocation8], 4
      %s56 = int_to_ptr.vmem [resolvable:$true] %s55
      %61 = dma.hbm_to_vmem [thread:$0]  %s3, 512, %s56, [#allocation7], 128, 128, 8
    $region17: #{tpu_custom_call.1} parent=1 // pred_fallthru
      _
    // Predicated region
    $region18: #{tpu_custom_call.1} parent=1 // pred_check
      _
    $region19: #{tpu_custom_call.1} parent=1 // pred_check_branch
      %63 = sbr.rel (0) target = $region21
    $region20: #{tpu_custom_call.1} parent=1 // pred_region
      %s65 = ssub.s32 256, 256
      %66 = vsyncadd [#allocation10], %s65
      %s67 = sshll.u32 [#allocation9], 4
      %s68 = int_to_ptr.vmem [resolvable:$true] %s67
      %73 = dma.hbm_to_vmem [thread:$0]  %s4, 256, %s68, [#allocation10], 128, 128, 8
    $region21: #{tpu_custom_call.1} parent=1 // pred_fallthru
      _
    // Predicated region
    $region22: #{tpu_custom_call.1} parent=1 // pred_check
      _
    $region23: #{tpu_custom_call.1} parent=1 // pred_check_branch
      %75 = sbr.rel (0) target = $region25
    $region24: #{tpu_custom_call.1} parent=1 // pred_region
      _
    $region25: #{tpu_custom_call.1} parent=1 // pred_fallthru
      _
    // Predicated region
    $region26: #{tpu_custom_call.1} parent=1 // pred_check
      _
    $region27: #{tpu_custom_call.1} parent=1 // pred_check_branch
      %77 = sbr.rel (0) target = $region29
    $region28: #{tpu_custom_call.1} parent=1 // pred_region
      _
    $region29: #{tpu_custom_call.1} parent=1 // pred_fallthru
      _
    // Predicated region
    $region30: #{tpu_custom_call.1} parent=1 // pred_check
      _
    $region31: #{tpu_custom_call.1} parent=1 // pred_check_branch
      %79 = sbr.rel (0) target = $region33
    $region32: #{tpu_custom_call.1} parent=1 // pred_region
      _
    $region33: #{tpu_custom_call.1} parent=1 // pred_fallthru
      _
    // Predicated region
    $region34: #{tpu_custom_call.1} parent=1 // pred_check
      _
    $region35: #{tpu_custom_call.1} parent=1 // pred_check_branch
      %81 = sbr.rel (0) target = $region37
    $region36: #{tpu_custom_call.1} parent=1 // pred_region
      _
    $region37: #{tpu_custom_call.1} parent=1 // pred_fallthru
      _
    // Predicated region
    $region38: #{tpu_custom_call.1} parent=1 // pred_check
      _
    $region39: #{tpu_custom_call.1} parent=1 // pred_check_branch
      %83 = sbr.rel (0) target = $region41
    $region40: #{tpu_custom_call.1} parent=1 // pred_region
      _
    $region41: #{tpu_custom_call.1} parent=1 // pred_fallthru
      _
    // Predicated region
    $region42: #{tpu_custom_call.1} parent=1 // pred_check
      _
    $region43: #{tpu_custom_call.1} parent=1 // pred_check_branch
      %85 = sbr.rel (0) target = $region45
    $region44: #{tpu_custom_call.1} parent=1 // pred_region
      _
    $region45: #{tpu_custom_call.1} parent=1 // pred_fallthru
      _
    // Predicated region
    $region46: #{tpu_custom_call.1} parent=1 // pred_check
      _
    $region47: #{tpu_custom_call.1} parent=1 // pred_check_branch
      %87 = sbr.rel (0) target = $region49
    $region48: #{tpu_custom_call.1} parent=1 // pred_region
      _
    $region49: #{tpu_custom_call.1} parent=1 // pred_fallthru
      _
    // Predicated region
    $region50: #{tpu_custom_call.1} parent=1 // pred_check
      _
    $region51: #{tpu_custom_call.1} parent=1 // pred_check_branch
      %89 = sbr.rel (0) target = $region53
    $region52: #{tpu_custom_call.1} parent=1 // pred_region
      _
    $region53: #{tpu_custom_call.1} parent=1 // pred_fallthru
      _
    // Predicated region
    $region54: #{tpu_custom_call.1} parent=1 // pred_check
      _
    $region55: #{tpu_custom_call.1} parent=1 // pred_check_branch
      %91 = sbr.rel (0) target = $region57
    $region56: #{tpu_custom_call.1} parent=1 // pred_region
      %92 = dma.done [#allocation4], 2048
    $region57: #{tpu_custom_call.1} parent=1 // pred_fallthru
      _
    // Predicated region
    $region58: #{tpu_custom_call.1} parent=1 // pred_check
      _
    $region59: #{tpu_custom_call.1} parent=1 // pred_check_branch
      %94 = sbr.rel (0) target = $region61
    $region60: #{tpu_custom_call.1} parent=1 // pred_region
      %95 = dma.done [#allocation7], 2048
    $region61: #{tpu_custom_call.1} parent=1 // pred_fallthru
      _
    // Predicated region
    $region62: #{tpu_custom_call.1} parent=1 // pred_check
      _
    $region63: #{tpu_custom_call.1} parent=1 // pred_check_branch
      %97 = sbr.rel (0) target = $region65
    $region64: #{tpu_custom_call.1} parent=1 // pred_region
      %98 = dma.done [#allocation7], 512
    $region65: #{tpu_custom_call.1} parent=1 // pred_fallthru
      _
    // Predicated region
    $region66: #{tpu_custom_call.1} parent=1 // pred_check
      _
    $region67: #{tpu_custom_call.1} parent=1 // pred_check_branch
      %100 = sbr.rel (0) target = $region69
    $region68: #{tpu_custom_call.1} parent=1 // pred_region
      %101 = dma.done [#allocation10], 256
    $region69: #{tpu_custom_call.1} parent=1 // pred_fallthru
      _
    %v102 = vld [vmem:[#allocation3] sm:$0xff]
    %v103 = vld [vmem:[#allocation3 + $0x8] sm:$0xff]
    %v104 = vld [vmem:[#allocation3 + $0x10] sm:$0xff]
    %v105 = vld [vmem:[#allocation3 + $0x18] sm:$0xff]
    %v106 = vld [vmem:[#allocation3 + $0x20] sm:$0xff]
    %v107 = vld [vmem:[#allocation3 + $0x28] sm:$0xff]
    %v108 = vld [vmem:[#allocation3 + $0x30] sm:$0xff]
    %v109 = vld [vmem:[#allocation3 + $0x38] sm:$0xff]
    %v110 = vld [vmem:[#allocation3 + $0x40] sm:$0xff]
    %v111 = vld [vmem:[#allocation3 + $0x48] sm:$0xff]
    %v112 = vld [vmem:[#allocation3 + $0x50] sm:$0xff]
    %v113 = vld [vmem:[#allocation3 + $0x58] sm:$0xff]
    %v114 = vld [vmem:[#allocation3 + $0x60] sm:$0xff]
    %v115 = vld [vmem:[#allocation3 + $0x68] sm:$0xff]
    %v116 = vld [vmem:[#allocation3 + $0x70] sm:$0xff]
    %v117 = vld [vmem:[#allocation3 + $0x78] sm:$0xff]
    %vm118 = vcmask 261120
    %v119 = vsel %vm118, %v102, 0.0
    %v120 = vsel %vm118, %v103, 0.0
    %v121 = vadd.f32 %v119, %v120
    %v122 = vrot.slane %v121, 4
    %v123 = vadd.f32 %v121, %v122
    %v124 = vrot.slane %v123, 2
    %v125 = vadd.f32 %v123, %v124
    %v126 = vrot.slane %v125, 1
    %v127 = vadd.f32 %v125, %v126
    %v128 = vsel %vm118, %v104, 0.0
    %v129 = vsel %vm118, %v105, 0.0
    %v130 = vadd.f32 %v128, %v129
    %v131 = vrot.slane %v130, 4
    %v132 = vadd.f32 %v130, %v131
    %v133 = vrot.slane %v132, 2
    %v134 = vadd.f32 %v132, %v133
    %v135 = vrot.slane %v134, 1
    %v136 = vadd.f32 %v134, %v135
    %v137 = vsel %vm118, %v106, 0.0
    %v138 = vsel %vm118, %v107, 0.0
    %v139 = vadd.f32 %v137, %v138
    %v140 = vrot.slane %v139, 4
    %v141 = vadd.f32 %v139, %v140
    %v142 = vrot.slane %v141, 2
    %v143 = vadd.f32 %v141, %v142
    %v144 = vrot.slane %v143, 1
    %v145 = vadd.f32 %v143, %v144
    %v146 = vsel %vm118, %v108, 0.0
    %v147 = vsel %vm118, %v109, 0.0
    %v148 = vadd.f32 %v146, %v147
    %v149 = vrot.slane %v148, 4
    %v150 = vadd.f32 %v148, %v149
    %v151 = vrot.slane %v150, 2
    %v152 = vadd.f32 %v150, %v151
    %v153 = vrot.slane %v152, 1
    %v154 = vadd.f32 %v152, %v153
    %v155 = vsel %vm118, %v110, 0.0
    %v156 = vsel %vm118, %v111, 0.0
    %v157 = vadd.f32 %v155, %v156
    %v158 = vrot.slane %v157, 4
    %v159 = vadd.f32 %v157, %v158
    %v160 = vrot.slane %v159, 2
    %v161 = vadd.f32 %v159, %v160
    %v162 = vrot.slane %v161, 1
    %v163 = vadd.f32 %v161, %v162
    %v164 = vsel %vm118, %v112, 0.0
    %v165 = vsel %vm118, %v113, 0.0
    %v166 = vadd.f32 %v164, %v165
    %v167 = vrot.slane %v166, 4
    %v168 = vadd.f32 %v166, %v167
    %v169 = vrot.slane %v168, 2
    %v170 = vadd.f32 %v168, %v169
    %v171 = vrot.slane %v170, 1
    %v172 = vadd.f32 %v170, %v171
    %v173 = vsel %vm118, %v114, 0.0
    %v174 = vsel %vm118, %v115, 0.0
    %v175 = vadd.f32 %v173, %v174
    %v176 = vrot.slane %v175, 4
    %v177 = vadd.f32 %v175, %v176
    %v178 = vrot.slane %v177, 2
    %v179 = vadd.f32 %v177, %v178
    %v180 = vrot.slane %v179, 1
    %v181 = vadd.f32 %v179, %v180
    %v182 = vsel %vm118, %v116, 0.0
    %v183 = vsel %vm118, %v117, 0.0
    %v184 = vadd.f32 %v182, %v183
    %v185 = vrot.slane %v184, 4
    %v186 = vadd.f32 %v184, %v185
    %v187 = vrot.slane %v186, 2
    %v188 = vadd.f32 %v186, %v187
    %v189 = vrot.slane %v188, 1
    %v190 = vadd.f32 %v188, %v189
    %v191 = vmul.f32 %v127, 0.0625
    %v192 = vmul.f32 %v136, 0.0625
    %v193 = vmul.f32 %v145, 0.0625
    %v194 = vmul.f32 %v154, 0.0625
    %v195 = vmul.f32 %v163, 0.0625
    %v196 = vmul.f32 %v172, 0.0625
    %v197 = vmul.f32 %v181, 0.0625
    %v198 = vmul.f32 %v190, 0.0625
    %v199 = vld [vmem:[#allocation6] sm:$0xff]
    %v200 = vld [vmem:[#allocation6 + $0x8] sm:$0xff]
    %v201 = vld [vmem:[#allocation6 + $0x10] sm:$0xff]
    %v202 = vld [vmem:[#allocation6 + $0x18] sm:$0xff]
    %v203 = vld [vmem:[#allocation6 + $0x20] sm:$0xff]
    %v204 = vld [vmem:[#allocation6 + $0x28] sm:$0xff]
    %v205 = vld [vmem:[#allocation6 + $0x30] sm:$0xff]
    %v206 = vld [vmem:[#allocation6 + $0x38] sm:$0xff]
    %v207 = vld [vmem:[#allocation6 + $0x40] sm:$0xff]
    %v208 = vld [vmem:[#allocation6 + $0x48] sm:$0xff]
    %v209 = vld [vmem:[#allocation6 + $0x50] sm:$0xff]
    %v210 = vld [vmem:[#allocation6 + $0x58] sm:$0xff]
    %v211 = vld [vmem:[#allocation6 + $0x60] sm:$0xff]
    %v212 = vld [vmem:[#allocation6 + $0x68] sm:$0xff]
    %v213 = vld [vmem:[#allocation6 + $0x70] sm:$0xff]
    %v214 = vld [vmem:[#allocation6 + $0x78] sm:$0xff]
    %v215 = vsel %vm118, %v199, 0.0
    %v216 = vsel %vm118, %v200, 0.0
    %v217 = vadd.f32 %v215, %v216
    %v218 = vrot.slane %v217, 4
    %v219 = vadd.f32 %v217, %v218
    %v220 = vrot.slane %v219, 2
    %v221 = vadd.f32 %v219, %v220
    %v222 = vrot.slane %v221, 1
    %v223 = vadd.f32 %v221, %v222
    %v224 = vsel %vm118, %v201, 0.0
    %v225 = vsel %vm118, %v202, 0.0
    %v226 = vadd.f32 %v224, %v225
    %v227 = vrot.slane %v226, 4
    %v228 = vadd.f32 %v226, %v227
    %v229 = vrot.slane %v228, 2
    %v230 = vadd.f32 %v228, %v229
    %v231 = vrot.slane %v230, 1
    %v232 = vadd.f32 %v230, %v231
    %v233 = vsel %vm118, %v203, 0.0
    %v234 = vsel %vm118, %v204, 0.0
    %v235 = vadd.f32 %v233, %v234
    %v236 = vrot.slane %v235, 4
    %v237 = vadd.f32 %v235, %v236
    %v238 = vrot.slane %v237, 2
    %v239 = vadd.f32 %v237, %v238
    %v240 = vrot.slane %v239, 1
    %v241 = vadd.f32 %v239, %v240
    %v242 = vsel %vm118, %v205, 0.0
    %v243 = vsel %vm118, %v206, 0.0
    %v244 = vadd.f32 %v242, %v243
    %v245 = vrot.slane %v244, 4
    %v246 = vadd.f32 %v244, %v245
    %v247 = vrot.slane %v246, 2
    %v248 = vadd.f32 %v246, %v247
    %v249 = vrot.slane %v248, 1
    %v250 = vadd.f32 %v248, %v249
    %v251 = vsel %vm118, %v207, 0.0
    %v252 = vsel %vm118, %v208, 0.0
    %v253 = vadd.f32 %v251, %v252
    %v254 = vrot.slane %v253, 4
    %v255 = vadd.f32 %v253, %v254
    %v256 = vrot.slane %v255, 2
    %v257 = vadd.f32 %v255, %v256
    %v258 = vrot.slane %v257, 1
    %v259 = vadd.f32 %v257, %v258
    %v260 = vsel %vm118, %v209, 0.0
    %v261 = vsel %vm118, %v210, 0.0
    %v262 = vadd.f32 %v260, %v261
    %v263 = vrot.slane %v262, 4
    %v264 = vadd.f32 %v262, %v263
    %v265 = vrot.slane %v264, 2
    %v266 = vadd.f32 %v264, %v265
    %v267 = vrot.slane %v266, 1
    %v268 = vadd.f32 %v266, %v267
    %v269 = vsel %vm118, %v211, 0.0
    %v270 = vsel %vm118, %v212, 0.0
    %v271 = vadd.f32 %v269, %v270
    %v272 = vrot.slane %v271, 4
    %v273 = vadd.f32 %v271, %v272
    %v274 = vrot.slane %v273, 2
    %v275 = vadd.f32 %v273, %v274
    %v276 = vrot.slane %v275, 1
    %v277 = vadd.f32 %v275, %v276
    %v278 = vsel %vm118, %v213, 0.0
    %v279 = vsel %vm118, %v214, 0.0
    %v280 = vadd.f32 %v278, %v279
    %v281 = vrot.slane %v280, 4
    %v282 = vadd.f32 %v280, %v281
    %v283 = vrot.slane %v282, 2
    %v284 = vadd.f32 %v282, %v283
    %v285 = vrot.slane %v284, 1
    %v286 = vadd.f32 %v284, %v285
    %v287 = vmul.f32 %v223, 0.0625
    %v288 = vmul.f32 %v232, 0.0625
    %v289 = vmul.f32 %v241, 0.0625
    %v290 = vmul.f32 %v250, 0.0625
    %v291 = vmul.f32 %v259, 0.0625
    %v292 = vmul.f32 %v268, 0.0625
    %v293 = vmul.f32 %v277, 0.0625
    %v294 = vmul.f32 %v286, 0.0625
    %v295 = vld [vmem:[%s2] sm:$0xff]
    %v296 = vld [vmem:[%s2 + $0x8] sm:$0xff]
    %v297 = vld [vmem:[#allocation8] sm:$0xff]
    %v298 = vld [vmem:[#allocation8 + $0x8] sm:$0xff]
    %v299 = vld [vmem:[#allocation8 + $0x10] sm:$0xff]
    %v300 = vld [vmem:[#allocation8 + $0x18] sm:$0xff]
    %v301 = vld [vmem:[#allocation9] sm:$0xff]
    %v302 = vld [vmem:[#allocation9 + $0x8] sm:$0xff]
    %v303 = vld [vmem:[%s5] sm:$0x1]
    %v304 = vld [vmem:[%s6] sm:$0x1]
    %v305 = vld [vmem:[%s7] sm:$0xff]
    %v306 = vld [vmem:[%s7 + $0x8] sm:$0xff]
    %v307 = vld [vmem:[%s7 + $0x10] sm:$0xff]
    %v308 = vld [vmem:[%s7 + $0x18] sm:$0xff]
    %v309 = vld [vmem:[%s8] sm:$0x1]
    %v310 = vld [vmem:[%s9] sm:$0x1]
    %v311 = vld [vmem:[%s10] sm:$0x1]
    %v312 = vld [vmem:[%s11] sm:$0x1]
    %v313 = vld [vmem:[#allocation2] sm:$0x1]
    %v314 = vlaneseq
    %v315 = vshrl.u32 %v314, 7
    %v316 = vadd.s32 %v315, 8
    %vm317 = vcmp.lt.s32.totalorder %v315, 8
    %vm318 = vcmp.lt.s32.totalorder %v316, 8
    %vm327 = vcmask 1041409
    %v328 = vsel %vm327, %v192, %v191
    %vm329 = vcmask 1042434
    %v330 = vsel %vm329, %v193, %v328
    %vm331 = vcmask 1043459
    %v332 = vsel %vm331, %v194, %v330
    %vm333 = vcmask 1044484
    %v334 = vsel %vm333, %v195, %v332
    %vm335 = vcmask 1045509
    %v336 = vsel %vm335, %v196, %v334
    %vm337 = vcmask 1046534
    %v338 = vsel %vm337, %v197, %v336
    %vm339 = vcmask 1047559
    %v340 = vsel %vm339, %v198, %v338
    %v349 = vsel %vm327, %v288, %v287
    %v350 = vsel %vm329, %v289, %v349
    %v351 = vsel %vm331, %v290, %v350
    %v352 = vsel %vm333, %v291, %v351
    %v353 = vsel %vm335, %v292, %v352
    %v354 = vsel %vm337, %v293, %v353
    %v355 = vsel %vm339, %v294, %v354
    %v356 = vsel %vm118, %v340, 0
    %v358 = vsel %vm118, %v355, 0
    %360 = vmatprep.subr.mxu0 0.0
    %361 = vmatpush1.msra.mxu0 0.0
    %362 = vmatprep.subr.mxu0 0.0
    %363 = vmatpush1.msra.mxu0 0.0
    %364 = vmatprep.subr.mxu0 0.0
    %365 = vmatpush1.msra.mxu0 0.0
    %366 = vmatprep.subr.mxu0 0.0
    %367 = vmatpush1.msra.mxu0 0.0
    %368 = vmatprep.subr.mxu0 0.0
    %369 = vmatpush1.msra.mxu0 0.0
    %370 = vmatprep.subr.mxu0 0.0
    %371 = vmatpush1.msra.mxu0 0.0
    %372 = vmatprep.subr.mxu0 0.0
    %373 = vmatpush1.msra.mxu0 0.0
    %374 = vmatprep.subr.mxu0 0.0
    %375 = vmatpush1.msra.mxu0 0.0
    %376 = vmatprep.subr.mxu0 0.0
    %377 = vmatpush1.msra.mxu0 0.0
    %378 = vmatprep.subr.mxu0 0.0
    %379 = vmatpush1.msra.mxu0 0.0
    %380 = vmatprep.subr.mxu0 0.0
    %381 = vmatpush1.msra.mxu0 0.0
    %382 = vmatprep.subr.mxu0 0.0
    %383 = vmatpush1.msra.mxu0 0.0
    %384 = vmatprep.subr.mxu0 0.0
    %385 = vmatpush1.msra.mxu0 %v300
    %386 = vmatprep.subr.mxu0 0.0
    %387 = vmatpush1.msra.mxu0 %v299
    %388 = vmatprep.subr.mxu0 0.0
    %389 = vmatpush1.msra.mxu0 %v298
    %390 = vmatprep.subr.mxu0 0.0
    %391 = vmatpush1.msra.mxu0 %v297
    %392 = vmatprep.subr.mxu0 0.0
    %393 = vmatpush2.msra.mxu0 0.0
    %394 = vmatprep.subr.mxu0 0.0
    %395 = vmatpush2.msra.mxu0 0.0
    %396 = vmatprep.subr.mxu0 0.0
    %397 = vmatpush2.msra.mxu0 0.0
    %398 = vmatprep.subr.mxu0 0.0
    %399 = vmatpush2.msra.mxu0 0.0
    %400 = vmatprep.subr.mxu0 0.0
    %401 = vmatpush2.msra.mxu0 0.0
    %402 = vmatprep.subr.mxu0 0.0
    %403 = vmatpush2.msra.mxu0 0.0
    %404 = vmatprep.subr.mxu0 0.0
    %405 = vmatpush2.msra.mxu0 0.0
    %406 = vmatprep.subr.mxu0 0.0
    %407 = vmatpush2.msra.mxu0 0.0
    %408 = vmatprep.subr.mxu0 0.0
    %409 = vmatpush2.msra.mxu0 0.0
    %410 = vmatprep.subr.mxu0 0.0
    %411 = vmatpush2.msra.mxu0 0.0
    %412 = vmatprep.subr.mxu0 0.0
    %413 = vmatpush2.msra.mxu0 0.0
    %414 = vmatprep.subr.mxu0 0.0
    %415 = vmatpush2.msra.mxu0 0.0
    %416 = vmatprep.subr.mxu0 0.0
    %417 = vmatpush2.msra.mxu0 0.0
    %418 = vmatprep.subr.mxu0 0.0
    %419 = vmatpush2.msra.mxu0 0.0
    %420 = vmatprep.subr.mxu0 0.0
    %421 = vmatpush2.msra.mxu0 0.0
    %422 = vmatprep.subr.mxu0 0.0
    %423 = vmatpush2.msra.mxu0 0.0
    %424 = vmatprep.mubr.f32.mxu0 0.0
    %425 = vmatmul.mubr.f32.gmra.mxu0 %v356
    %v426 = vpop.f32.mrf.mxu0
    %v427 = vadd.f32 0.0, %v426
    %v428 = vpop.f32.mrf.mxu0
    %429 = vmatprep.mubr.f32.mxu0 0.0
    %430 = vmatmul.mubr.f32.gmra.mxu0 %v358
    %v431 = vpop.f32.mrf.mxu0
    %v432 = vadd.f32 0.0, %v431
    %v433 = vpop.f32.mrf.mxu0
    %434 = vdwg.mxu0
    %v435 = vsel %vm317, 1, 0
    %v436 = vsel %vm318, 1, 0
    %vm437 = vcmp.eq.s32.totalorder %v435, 1
    %vm438 = vcmp.eq.s32.totalorder %v436, 1
    %441 = vrot.lane.b32.xlu0 %v427, 96
    %v442 = vpop.permute.xlu0 %441
    %443 = vrot.lane.b32.xlu0 %v432, 96
    %v444 = vpop.permute.xlu0 %443
    %v447 = vsel %vm437, %v427, %v442
    %v448 = vsel %vm438, %v432, %v444
    %v449 = vadd.f32 %v447, %v301
    %v450 = vadd.f32 %v448, %v302
    %v451 = vsel %vm118, %v449, 0.0
    %452 = vadd.xlane.f32.xlu0 %v451
    %v453 = vpop.xlane.xlu0 %452
    %v454 = vsel %vm118, %v450, 0.0
    %455 = vadd.xlane.f32.xlu0 %v454
    %v456 = vpop.xlane.xlu0 %455
    %v457 = vrcp.pop 32.0
    %v458 = vmul.f32 %v453, %v457
    %v459 = vmul.f32 %v456, %v457
    %v460 = vsub.f32 %v449, %v458
    %v461 = vsub.f32 %v450, %v459
    %v462 = vmul.f32 %v460, %v460
    %v463 = vmul.f32 %v461, %v461
    %v464 = vsel %vm118, %v462, 0.0
    %465 = vadd.xlane.f32.xlu0 %v464
    %v466 = vpop.xlane.xlu0 %465
    %v467 = vsel %vm118, %v463, 0.0
    %468 = vadd.xlane.f32.xlu0 %v467
    %v469 = vpop.xlane.xlu0 %468
    %v470 = vmul.f32 %v466, %v457
    %v471 = vmul.f32 %v469, %v457
    %v472 = vadd.f32 %v470, 1e-05
    %v473 = vadd.f32 %v471, 1e-05
    %v474 = vrsqrt.pop %v472
    %v475 = vrsqrt.pop %v473
    %v476 = vmul.f32 %v460, %v474
    %v477 = vmul.f32 %v461, %v475
    %v479 = vlaneseq
    %v480 = vshrl.u32 %v479, 7
    %v481 = vsub.s32 0, %v480
    %v482 = vrot.slane %v303, %v481
    %v484 = vmul.f32 %v476, %v482
    %v485 = vmul.f32 %v477, %v482
    %v487 = vlaneseq
    %v488 = vshrl.u32 %v487, 7
    %v489 = vsub.s32 0, %v488
    %v490 = vrot.slane %v304, %v489
    %v492 = vadd.f32 %v484, %v490
    %v493 = vadd.f32 %v485, %v490
    %v495 = vsel %vm118, %v492, 0
    %v498 = vsel %vm118, %v493, 0
    %500 = vmatprep.subr.mxu0 0.0
    %501 = vmatpush1.msra.mxu0 0.0
    %502 = vmatprep.subr.mxu0 0.0
    %503 = vmatpush1.msra.mxu0 0.0
    %504 = vmatprep.subr.mxu0 0.0
    %505 = vmatpush1.msra.mxu0 0.0
    %506 = vmatprep.subr.mxu0 0.0
    %507 = vmatpush1.msra.mxu0 0.0
    %508 = vmatprep.subr.mxu0 0.0
    %509 = vmatpush1.msra.mxu0 0.0
    %510 = vmatprep.subr.mxu0 0.0
    %511 = vmatpush1.msra.mxu0 0.0
    %512 = vmatprep.subr.mxu0 0.0
    %513 = vmatpush1.msra.mxu0 0.0
    %514 = vmatprep.subr.mxu0 0.0
    %515 = vmatpush1.msra.mxu0 0.0
    %516 = vmatprep.subr.mxu0 0.0
    %517 = vmatpush1.msra.mxu0 0.0
    %518 = vmatprep.subr.mxu0 0.0
    %519 = vmatpush1.msra.mxu0 0.0
    %520 = vmatprep.subr.mxu0 0.0
    %521 = vmatpush1.msra.mxu0 0.0
    %522 = vmatprep.subr.mxu0 0.0
    %523 = vmatpush1.msra.mxu0 0.0
    %524 = vmatprep.subr.mxu0 0.0
    %525 = vmatpush1.msra.mxu0 %v308
    %526 = vmatprep.subr.mxu0 0.0
    %527 = vmatpush1.msra.mxu0 %v307
    %528 = vmatprep.subr.mxu0 0.0
    %529 = vmatpush1.msra.mxu0 %v306
    %530 = vmatprep.subr.mxu0 0.0
    %531 = vmatpush1.msra.mxu0 %v305
    %532 = vmatprep.subr.mxu0 0.0
    %533 = vmatpush2.msra.mxu0 0.0
    %534 = vmatprep.subr.mxu0 0.0
    %535 = vmatpush2.msra.mxu0 0.0
    %536 = vmatprep.subr.mxu0 0.0
    %537 = vmatpush2.msra.mxu0 0.0
    %538 = vmatprep.subr.mxu0 0.0
    %539 = vmatpush2.msra.mxu0 0.0
    %540 = vmatprep.subr.mxu0 0.0
    %541 = vmatpush2.msra.mxu0 0.0
    %542 = vmatprep.subr.mxu0 0.0
    %543 = vmatpush2.msra.mxu0 0.0
    %544 = vmatprep.subr.mxu0 0.0
    %545 = vmatpush2.msra.mxu0 0.0
    %546 = vmatprep.subr.mxu0 0.0
    %547 = vmatpush2.msra.mxu0 0.0
    %548 = vmatprep.subr.mxu0 0.0
    %549 = vmatpush2.msra.mxu0 0.0
    %550 = vmatprep.subr.mxu0 0.0
    %551 = vmatpush2.msra.mxu0 0.0
    %552 = vmatprep.subr.mxu0 0.0
    %553 = vmatpush2.msra.mxu0 0.0
    %554 = vmatprep.subr.mxu0 0.0
    %555 = vmatpush2.msra.mxu0 0.0
    %556 = vmatprep.subr.mxu0 0.0
    %557 = vmatpush2.msra.mxu0 0.0
    %558 = vmatprep.subr.mxu0 0.0
    %559 = vmatpush2.msra.mxu0 0.0
    %560 = vmatprep.subr.mxu0 0.0
    %561 = vmatpush2.msra.mxu0 0.0
    %562 = vmatprep.subr.mxu0 0.0
    %563 = vmatpush2.msra.mxu0 0.0
    %564 = vmatprep.mubr.f32.mxu0 0.0
    %565 = vmatmul.mubr.f32.gmra.mxu0 %v495
    %v566 = vpop.f32.mrf.mxu0
    %v567 = vadd.f32 0.0, %v566
    %v568 = vpop.f32.mrf.mxu0
    %569 = vmatprep.mubr.f32.mxu0 0.0
    %570 = vmatmul.mubr.f32.gmra.mxu0 %v498
    %v571 = vpop.f32.mrf.mxu0
    %v572 = vadd.f32 0.0, %v571
    %v573 = vpop.f32.mrf.mxu0
    %574 = vdwg.mxu0
    %576 = vrot.lane.b32.xlu0 %v572, 96
    %v577 = vpop.permute.xlu0 %576
    %vm579 = vcmask 64512
    %v581 = vsel %vm579, %v295, 0
    %v584 = vsel %vm579, %v296, 0
    %586 = vmatprep.subr.mxu0 0.0
    %587 = vmatpush1.msra.mxu0 0.0
    %588 = vmatprep.subr.mxu0 0.0
    %589 = vmatpush1.msra.mxu0 0.0
    %590 = vmatprep.subr.mxu0 0.0
    %591 = vmatpush1.msra.mxu0 0.0
    %592 = vmatprep.subr.mxu0 0.0
    %593 = vmatpush1.msra.mxu0 0.0
    %594 = vmatprep.subr.mxu0 0.0
    %595 = vmatpush1.msra.mxu0 0.0
    %596 = vmatprep.subr.mxu0 0.0
    %597 = vmatpush1.msra.mxu0 0.0
    %598 = vmatprep.subr.mxu0 0.0
    %599 = vmatpush1.msra.mxu0 0.0
    %600 = vmatprep.subr.mxu0 0.0
    %601 = vmatpush1.msra.mxu0 0.0
    %602 = vmatprep.subr.mxu0 0.0
    %603 = vmatpush1.msra.mxu0 0.0
    %604 = vmatprep.subr.mxu0 0.0
    %605 = vmatpush1.msra.mxu0 0.0
    %606 = vmatprep.subr.mxu0 0.0
    %607 = vmatpush1.msra.mxu0 0.0
    %608 = vmatprep.subr.mxu0 0.0
    %609 = vmatpush1.msra.mxu0 0.0
    %610 = vmatprep.subr.mxu0 0.0
    %611 = vmatpush1.msra.mxu0 0.0
    %612 = vmatprep.subr.mxu0 0.0
    %613 = vmatpush1.msra.mxu0 0.0
    %614 = vmatprep.subr.mxu0 0.0
    %615 = vmatpush1.msra.mxu0 0.0
    %616 = vmatprep.subr.mxu0 0.0
    %617 = vmatpush1.msra.mxu0 %v577
    %618 = vmatprep.subr.mxu0 0.0
    %619 = vmatpush2.msra.mxu0 0.0
    %620 = vmatprep.subr.mxu0 0.0
    %621 = vmatpush2.msra.mxu0 0.0
    %622 = vmatprep.subr.mxu0 0.0
    %623 = vmatpush2.msra.mxu0 0.0
    %624 = vmatprep.subr.mxu0 0.0
    %625 = vmatpush2.msra.mxu0 0.0
    %626 = vmatprep.subr.mxu0 0.0
    %627 = vmatpush2.msra.mxu0 0.0
    %628 = vmatprep.subr.mxu0 0.0
    %629 = vmatpush2.msra.mxu0 0.0
    %630 = vmatprep.subr.mxu0 0.0
    %631 = vmatpush2.msra.mxu0 0.0
    %632 = vmatprep.subr.mxu0 0.0
    %633 = vmatpush2.msra.mxu0 0.0
    %634 = vmatprep.subr.mxu0 0.0
    %635 = vmatpush2.msra.mxu0 0.0
    %636 = vmatprep.subr.mxu0 0.0
    %637 = vmatpush2.msra.mxu0 0.0
    %638 = vmatprep.subr.mxu0 0.0
    %639 = vmatpush2.msra.mxu0 0.0
    %640 = vmatprep.subr.mxu0 0.0
    %641 = vmatpush2.msra.mxu0 0.0
    %642 = vmatprep.subr.mxu0 0.0
    %643 = vmatpush2.msra.mxu0 0.0
    %644 = vmatprep.subr.mxu0 0.0
    %645 = vmatpush2.msra.mxu0 0.0
    %646 = vmatprep.subr.mxu0 0.0
    %647 = vmatpush2.msra.mxu0 0.0
    %648 = vmatprep.subr.mxu0 0.0
    %649 = vmatpush2.msra.mxu0 0.0
    %650 = vmatprep.mubr.f32.mxu0 0.0
    %651 = vmatmul.mubr.f32.gmra.mxu0 %v581
    %v652 = vpop.f32.mrf.mxu0
    %v653 = vadd.f32 0.0, %v652
    %v654 = vpop.f32.mrf.mxu0
    %655 = vmatprep.mubr.f32.mxu0 0.0
    %656 = vmatmul.mubr.f32.gmra.mxu0 %v584
    %v657 = vpop.f32.mrf.mxu0
    %v658 = vadd.f32 0.0, %v657
    %v659 = vpop.f32.mrf.mxu0
    %660 = vdwg.mxu0
    %v661 = vadd.f32 %v567, %v653
    %v662 = vadd.f32 %v567, %v658
    %v664 = vlaneseq
    %v665 = vshrl.u32 %v664, 7
    %v666 = vsub.s32 0, %v665
    %v667 = vrot.slane %v309, %v666
    %v669 = vadd.f32 %v661, %v667
    %v670 = vadd.f32 %v662, %v667
    %v671 = vsel %vm118, %v669, 0.0
    %672 = vadd.xlane.f32.xlu0 %v671
    %v673 = vpop.xlane.xlu0 %672
    %v674 = vsel %vm118, %v670, 0.0
    %675 = vadd.xlane.f32.xlu0 %v674
    %v676 = vpop.xlane.xlu0 %675
    %v677 = vmul.f32 %v673, %v457
    %v678 = vmul.f32 %v676, %v457
    %v679 = vsub.f32 %v669, %v677
    %v680 = vsub.f32 %v670, %v678
    %v681 = vmul.f32 %v679, %v679
    %v682 = vmul.f32 %v680, %v680
    %v683 = vsel %vm118, %v681, 0.0
    %684 = vadd.xlane.f32.xlu0 %v683
    %v685 = vpop.xlane.xlu0 %684
    %v686 = vsel %vm118, %v682, 0.0
    %687 = vadd.xlane.f32.xlu0 %v686
    %v688 = vpop.xlane.xlu0 %687
    %v689 = vmul.f32 %v685, %v457
    %v690 = vmul.f32 %v688, %v457
    %v691 = vadd.f32 %v689, 1e-05
    %v692 = vadd.f32 %v690, 1e-05
    %v693 = vrsqrt.pop %v691
    %v694 = vrsqrt.pop %v692
    %v695 = vmul.f32 %v679, %v693
    %v696 = vmul.f32 %v680, %v694
    %v698 = vlaneseq
    %v699 = vshrl.u32 %v698, 7
    %v700 = vsub.s32 0, %v699
    %v701 = vrot.slane %v310, %v700
    %v703 = vmul.f32 %v695, %v701
    %v704 = vmul.f32 %v696, %v701
    %v706 = vlaneseq
    %v707 = vshrl.u32 %v706, 7
    %v708 = vsub.s32 0, %v707
    %v709 = vrot.slane %v311, %v708
    %v711 = vadd.f32 %v703, %v709
    %v712 = vadd.f32 %v704, %v709
    %v713 = vxor.u32 %v711, 2147483648
    %v714 = vxor.u32 %v712, 2147483648
    %v715 = vmul.f32 %v713, 1.442695
    %v716 = vpow.pop %v715
    %v717 = vmul.f32 %v714, 1.442695
    %v718 = vpow.pop %v717
    %v719 = vadd.f32 %v716, 1.0
    %v720 = vadd.f32 %v718, 1.0
    %v721 = vrcp.pop %v719
    %v722 = vmul.f32 1.0, %v721
    %v723 = vrcp.pop %v720
    %v724 = vmul.f32 1.0, %v723
    %v725 = vmul.f32 %v711, %v722
    %v726 = vmul.f32 %v712, %v724
    %v728 = vlaneseq
    %v729 = vshrl.u32 %v728, 7
    %v730 = vsub.s32 0, %v729
    %v731 = vrot.slane %v312, %v730
    %v733 = vmul.f32 %v725, %v731
    %v734 = vmul.f32 %v726, %v731
    %v735 = vsel %vm118, %v733, 0.0
    %736 = vadd.xlane.f32.xlu0 %v735
    %v737 = vpop.xlane.xlu0 %736
    %v738 = vsel %vm118, %v734, 0.0
    %739 = vadd.xlane.f32.xlu0 %v738
    %v740 = vpop.xlane.xlu0 %739
    %v742 = vlaneseq
    %v743 = vshrl.u32 %v742, 7
    %v744 = vsub.s32 0, %v743
    %v745 = vrot.slane %v313, %v744
    %v747 = vadd.f32 %v737, %v745
    %v748 = vadd.f32 %v740, %v745
    %v749 = vsel %vm317, %v747, 0.0
    %v750 = vsel %vm318, %v748, 0.0
    %vm751 = vcmask 7168
    %v752 = vsel %vm751, %v749, 0.0
    %v753 = vsel %vm751, %v750, 0.0
    %v754 = vadd.f32 %v752, %v753
    %755 = vadd.xlane.f32.xlu0 %v754
    %v756 = vpop.xlane.xlu0 %755
    %v757 = vrot.slane %v756, 4
    %v758 = vadd.f32 %v756, %v757
    %v759 = vrot.slane %v758, 2
    %v760 = vadd.f32 %v758, %v759
    %v761 = vrot.slane %v760, 1
    %v762 = vadd.f32 %v760, %v761
    %s763 = vtos %v762
    %s764 = smul.f32 %s763, 0.125
    %v765 = vsel %vm317, -inf, %v747
    %v766 = vsel %vm318, -inf, %v748
    %v767 = vsel %vm751, %v765, -inf
    %v768 = vsel %vm751, %v766, -inf
    %v769 = vmax.f32 %v767, %v768
    %770 = vmax.xlane.f32.xlu0 %v769
    %v771 = vpop.xlane.xlu0 %770
    %v772 = vrot.slane %v771, 4
    %v773 = vmax.f32 %v771, %v772
    %v774 = vrot.slane %v773, 2
    %v775 = vmax.f32 %v773, %v774
    %v776 = vrot.slane %v775, 1
    %v777 = vmax.f32 %v775, %v776
    %s778 = vtos %v777
    %v779 = vstv %s778
    %v780 = vsub.f32 %v747, %v779
    %v781 = vsub.f32 %v748, %v779
    %v782 = vmul.f32 %v780, 1.442695
    %v783 = vpow.pop %v782
    %v784 = vmul.f32 %v781, 1.442695
    %v785 = vpow.pop %v784
    %v786 = vsel %vm317, 0.0, %v783
    %v787 = vsel %vm318, 0.0, %v785
    %v788 = vsel %vm751, %v786, 0.0
    %v789 = vsel %vm751, %v787, 0.0
    %v790 = vadd.f32 %v788, %v789
    %791 = vadd.xlane.f32.xlu0 %v790
    %v792 = vpop.xlane.xlu0 %791
    %v793 = vrot.slane %v792, 4
    %v794 = vadd.f32 %v792, %v793
    %v795 = vrot.slane %v794, 2
    %v796 = vadd.f32 %v794, %v795
    %v797 = vrot.slane %v796, 1
    %v798 = vadd.f32 %v796, %v797
    %s799 = vtos %v798
    %v800 = vstv %s799
    %v801 = vlog2.pop %v800
    %v802 = vmul.f32 %v801, 0.6931472
    %s803 = vtos %v802
    %s804 = sadd.f32 %s778, %s803
    %s805 = ssub.f32 %s764, %s804
    %s806 = sadd.f32 %s805, 2.0794415
    %s807 = scalar_lea.smem [#allocation11], 0
    %808 = sst [smem:[%s807]] %s806
    // Predicated region
    $region70: #{tpu_custom_call.1} parent=1 // pred_check
      _
    $region71: #{tpu_custom_call.1} parent=1 // pred_check_branch
      %810 = sbr.rel (0) target = $region73
    $region72: #{tpu_custom_call.1} parent=1 // pred_region
      %s812 = ssub.s32 16, 16
      %813 = vsyncadd [#allocation5], %s812
      %816 = dma.smem_to_hbm [#allocation11], 16, %s13, [#allocation5]
    $region73: #{tpu_custom_call.1} parent=1 // pred_fallthru
      _
    // Predicated region
    $region74: #{tpu_custom_call.1} parent=1 // pred_check
      _
    $region75: #{tpu_custom_call.1} parent=1 // pred_check_branch
      %818 = sbr.rel (0) target = $region77
    $region76: #{tpu_custom_call.1} parent=1 // pred_region
      %819 = dma.done [#allocation5], 16
    $region77: #{tpu_custom_call.1} parent=1 // pred_fallthru
      _
    %820 = sfence
    %821 = vsyncpa [#allocation4], 1
    %822 = vsyncpa [#allocation7], 1
    %823 = vsyncpa [#allocation10], 1
    %824 = vsyncpa [#allocation5], 1

</llo_original>
